<compile_context>
chip_gen: v7x
topology: tpu7x:2x2x1
jax: 0.10.0
libtpu: 0.0.40
codegen_flags: <defaults>
</compile_context>

<pallas_src>
import functools

import jax
import jax.numpy as jnp
from jax.experimental import pallas as pl
from jax.experimental.pallas import tpu as pltpu

HIDDEN = 128


def _elu(x):
    # nn.ELU with alpha=1.0 (runs in plain XLA only, so expm1 is safe).
    return jnp.where(x > 0, x, jnp.expm1(x))


def _fc3_kernel(h_ref, w3_ref, b3_ref, out_ref):
    """Per-output-tile fc3 projection: (B,128)bf16 @ (128,T)int8->bf16 + b3."""
    w = w3_ref[...].astype(jnp.bfloat16)   # int8 -> bf16 (scale folded into h)
    acc = jnp.dot(h_ref[...], w, preferred_element_type=jnp.float32)
    out_ref[...] = (acc + b3_ref[...]).astype(out_ref.dtype)


def _pick_tiling(out_dim, max_tile_lanes=4096, max_pad_frac=0.10):
    """Choose (tile_out, grid): lane-dense tiles (multiple of 128), preferring
    a small EVEN grid (>=2 steps per TensorCore on v7x, even megacore split)
    with bounded padding."""
    groups = -(-out_dim // 128)
    max_tile_groups = max(1, max_tile_lanes // 128)
    candidates = (list(range(4, groups + 1, 2)) + [2]
                  + list(range(3, groups + 1, 2)) + [1])
    for g in candidates:
        if g < 1 or g > groups:
            continue
        tile_groups = -(-groups // g)
        if tile_groups > max_tile_groups:
            continue
        pad_groups = g * tile_groups - groups
        if pad_groups / groups > max_pad_frac:
            continue
        return tile_groups * 128, g
    return 128, groups  # fallback: one 128-lane group per step


def prepare_params(params):
    """One-time host-side prep: pick tiling, quantize W3 to int8 (per-tensor
    scale) and zero-pad W3/b3 to the tiled width."""
    w1, b1, w2, b2, w4, b4, w3, b3 = params
    out_dim = w3.shape[1]
    tile_out, grid = _pick_tiling(out_dim)
    padded = tile_out * grid
    pad = padded - out_dim

    # Symmetric per-tensor int8 quantization of the dominant HBM stream.
    w3_scale = jnp.maximum(jnp.max(jnp.abs(w3)), 1e-12) / 127.0
    w3_q = jnp.clip(jnp.round(w3 / w3_scale), -127, 127).astype(jnp.int8)
    w3_q = jnp.pad(w3_q, ((0, 0), (0, pad)))          # zero pad columns
    b3_p = jnp.pad(b3.astype(jnp.float32), ((0, 0), (0, pad)))

    prepared = (w1, b1, w2, b2, w4, b4, w3_q, b3_p,
                w3_scale.astype(jnp.float32))
    return prepared, out_dim, tile_out


@functools.partial(jax.jit, static_argnames=("out_dim", "tile_out"))
def stochastic_decoder_forward(x, prepared_params, *, out_dim, tile_out):
    """Fused forward pass. x: (B, bottleneck_dim) f32. Returns (B, out_dim) f32."""
    w1, b1, w2, b2, w4, b4, w3_q, b3, w3_scale = prepared_params
    B = x.shape[0]
    padded = w3_q.shape[1]
    assert padded % tile_out == 0
    grid = padded // tile_out

    # Hidden path: tiny (B,128) activations, computed once in plain XLA
    # (hoisted out of the kernel per the performance review).
    h = _elu(x @ w1 + b1)
    h = _elu(h @ w2 + b2)
    h = _elu(h @ w4 + b4)
    # Fold the int8 dequant scale into the tiny LHS; bf16 for a single-pass
    # MXU matmul against the dequantized weight tile.
    h_s = (h * w3_scale).astype(jnp.bfloat16)

    out = pl.pallas_call(
        _fc3_kernel,
        # True output width: the final partial tile is masked by Pallas, so no
        # post-kernel slice/copy is needed (W3/b3 pad columns are zero).
        out_shape=jax.ShapeDtypeStruct((B, out_dim), jnp.float32),
        grid_spec=pltpu.PrefetchScalarGridSpec(
            num_scalar_prefetch=0,
            grid=(grid,),
            in_specs=[
                pl.BlockSpec((B, HIDDEN), lambda j: (0, 0)),         # h (resident)
                pl.BlockSpec((HIDDEN, tile_out), lambda j: (0, j)),  # W3 int8 tile
                pl.BlockSpec((1, tile_out), lambda j: (0, j)),       # b3 tile
            ],
            out_specs=pl.BlockSpec((B, tile_out), lambda j: (0, j)),
        ),
        compiler_params=pltpu.CompilerParams(
            dimension_semantics=("parallel",)),   # no cross-step carry
    )(h_s, w3_q, b3)
    return out


def init_params(key, bottleneck_dim, output_dim):
    """Deterministic synthetic init mirroring the module's __init__.

    Weights ~ U(-0.005, 0.005) as in the module; biases use PyTorch Linear's
    default U(-1/sqrt(fan_in), 1/sqrt(fan_in)). Weights stored transposed
    (in, out); biases stored as (1, out).
    """
    ks = jax.random.split(key, 8)
    u = lambda k, shape, lim: jax.random.uniform(
        k, shape, jnp.float32, minval=-lim, maxval=lim)
    w1 = u(ks[0], (bottleneck_dim, HIDDEN), 0.005)
    b1 = u(ks[1], (1, HIDDEN), 1.0 / jnp.sqrt(bottleneck_dim))
    w2 = u(ks[2], (HIDDEN, HIDDEN), 0.005)
    b2 = u(ks[3], (1, HIDDEN), 1.0 / jnp.sqrt(HIDDEN))
    w4 = u(ks[4], (HIDDEN, HIDDEN), 0.005)
    b4 = u(ks[5], (1, HIDDEN), 1.0 / jnp.sqrt(HIDDEN))
    w3 = u(ks[6], (HIDDEN, output_dim), 0.005)
    b3 = u(ks[7], (1, output_dim), 1.0 / jnp.sqrt(HIDDEN))
    # TODO(synk): self.log_var / self.variance are unused in forward(); omitted.
    return (w1, b1, w2, b2, w4, b4, w3, b3)


def reference_forward(x, params):
    """Pure-JAX all-f32 reference with the original module semantics."""
    w1, b1, w2, b2, w4, b4, w3, b3 = params
    h = _elu(x @ w1 + b1)
    h = _elu(h @ w2 + b2)
    h = _elu(h @ w4 + b4)
    return h @ w3 + b3


if __name__ == "__main__":
    # Module shapes: bottleneck_dim=1, output_dim=8252 (not a multiple of 128,
    # exercising the masked final tile); small batch.
    B, BOTTLENECK, OUTPUT_DIM = 16, 1, 8252

    key = jax.random.PRNGKey(0)
    k_x, k_p = jax.random.split(key)
    x = jax.random.normal(k_x, (B, BOTTLENECK), jnp.float32)
    params = init_params(k_p, BOTTLENECK, OUTPUT_DIM)

    prepared, out_dim, tile_out = prepare_params(params)
    out = stochastic_decoder_forward(x, prepared, out_dim=out_dim,
                                     tile_out=tile_out)
    out = jax.block_until_ready(out)

    ref = reference_forward(x, params)
    assert out.shape == (B, OUTPUT_DIM)
    # int8 fc3 weights (per-tensor scale) + bf16 LHS => slightly looser
    # tolerance vs the all-f32 reference.
    max_err = jnp.max(jnp.abs(out - ref))
    assert jnp.allclose(out, ref, atol=5e-3, rtol=2e-2), (
        f"mismatch vs reference: max abs err = {max_err}")
    print("KERNEL_OK")
</pallas_src>

<mosaic_0001>
module attributes {stable_mosaic.version = 11 : i64} {
  func.func @_fc3_kernel(%arg0: i32, %arg1: memref<16x128xbf16, #tpu.memory_space<vmem>>, %arg2: memref<128x2176xi8, #tpu.memory_space<vmem>>, %arg3: memref<1x2176xf32, #tpu.memory_space<vmem>>, %arg4: memref<16x2176xf32, #tpu.memory_space<vmem>>) attributes {dimension_semantics = [#tpu.dimension_semantics<parallel>], iteration_bounds = array<i64: 4>, scalar_prefetch = 0 : i64, scratch_operands = 0 : i64, tpu.core_type = #tpu.core_type<tc>, window_params = [{pipeline_mode = #tpu.pipeline_mode<synchronous>, transform_indices = @transform_0, window_bounds = array<i64: 16, 128>}, {transform_indices = @transform_1, window_bounds = array<i64: 128, 2176>}, {transform_indices = @transform_2, window_bounds = array<i64: 1, 2176>}, {transform_indices = @transform_3, window_bounds = array<i64: 16, 2176>}]} {
    %c0 = arith.constant 0 : index
    %c0_0 = arith.constant 0 : index
    %0 = vector.load %arg2[%c0, %c0_0] : memref<128x2176xi8, #tpu.memory_space<vmem>>, vector<128x2176xi8>
    %1 = arith.sitofp %0 : vector<128x2176xi8> to vector<128x2176xbf16>
    %c0_1 = arith.constant 0 : index
    %c0_2 = arith.constant 0 : index
    %2 = vector.load %arg1[%c0_1, %c0_2] : memref<16x128xbf16, #tpu.memory_space<vmem>>, vector<16x128xbf16>
    %cst = arith.constant dense<0.000000e+00> : vector<16x2176xf32>
    %3 = tpu.matmul %2, %1, %cst {dimension_numbers = #tpu.dot_dimension_numbers<[1], [0], [0], [1], [0, 0, 1, 1], [], []>} : vector<16x128xbf16>, vector<128x2176xbf16>, vector<16x2176xf32> -> vector<16x2176xf32>
    %c0_3 = arith.constant 0 : index
    %c0_4 = arith.constant 0 : index
    %4 = vector.load %arg3[%c0_3, %c0_4] : memref<1x2176xf32, #tpu.memory_space<vmem>>, vector<1x2176xf32>
    %5 = vector.broadcast %4 : vector<1x2176xf32> to vector<16x2176xf32>
    %6 = arith.addf %3, %5 : vector<16x2176xf32>
    %c0_5 = arith.constant 0 : index
    %c0_6 = arith.constant 0 : index
    %7 = vector.load %arg4[%c0_5, %c0_6] : memref<16x2176xf32, #tpu.memory_space<vmem>>, vector<16x2176xf32>
    tpu.vector_store %arg4[%c0_5, %c0_6], %6 {strides = array<i32>} : memref<16x2176xf32, #tpu.memory_space<vmem>>, vector<16x2176xf32>,
    return
  }
  func.func @transform_0(%arg0: i32) -> (i32, i32) {
    %c0_i32 = arith.constant 0 : i32
    %c0_i32_0 = arith.constant 0 : i32
    %c0_i32_1 = arith.constant 0 : i32
    return %c0_i32, %c0_i32_0 : i32, i32
  }
  func.func @transform_1(%arg0: i32) -> (i32, i32) {
    %c0_i32 = arith.constant 0 : i32
    %c0_i32_0 = arith.constant 0 : i32
    return %c0_i32, %arg0 : i32, i32
  }
  func.func @transform_2(%arg0: i32) -> (i32, i32) {
    %c0_i32 = arith.constant 0 : i32
    %c0_i32_0 = arith.constant 0 : i32
    return %c0_i32, %arg0 : i32, i32
  }
  func.func @transform_3(%arg0: i32) -> (i32, i32) {
    %c0_i32 = arith.constant 0 : i32
    %c0_i32_0 = arith.constant 0 : i32
    return %c0_i32, %arg0 : i32, i32
  }
}

</mosaic_0001>

<llo_original>
// kernel: stochastic_decoder_forward.1
$region0: #{stochastic_decoder_forward.1}
  #allocation0 [shape = 'u32[]', space=smem, size = 0x4, offset = 0x4, fixed_abs, tag = 'smem constant byte address 0x4 - core index']
  #allocation1 [shape = 'u32[144,128]{1,0:T(1,128)}', space=vmem, size = 0x12000, scoped, tag = 'internal scratch']
  %s0 = inlined_call_operand.vmem [shape: bf16[16,128], index: 0, kind: input, shape index: {}]
  %s1 = inlined_call_operand.hbm [shape: s8[128,8704], index: 1, kind: input, shape index: {}]
  %s2 = inlined_call_operand.hbm [shape: f32[1,8704], index: 2, kind: input, shape index: {}]
  %s3 = inlined_call_operand.hbm [shape: f32[16,8252], index: 3, kind: output, shape index: {}]
  %s4 = sld [smem:[#allocation0]]
  $region53: #{stochastic_decoder_forward.1} parent=0
    _
  %s6 = ssub.s32 1, %s4
  %s7 = scalar_select 0, %s6, %s4
  $region1: #{stochastic_decoder_forward.1} parent=0
    #allocation2 [shape = 'u8[557056]{0}', space=vmem, size = 0x88000, scoped, tag = 'input window, operand 1']
    #allocation3 [shape = 's32[2]{0}', space=sflag, size = 0x8, scoped, tag = 'scoped memory for stochastic_decoder_forward.1']
    #allocation4 [shape = 's32[2]{0}', space=sflag, size = 0x8, scoped, tag = 'scoped memory for stochastic_decoder_forward.1']
    #allocation5 [shape = 'u8[17408]{0}', space=vmem, size = 0x4400, scoped, tag = 'input window, operand 2']
    #allocation6 [shape = 's32[2]{0}', space=sflag, size = 0x8, scoped, tag = 'scoped memory for stochastic_decoder_forward.1']
    #allocation7 [shape = 'u8[278528]{0}', space=vmem, size = 0x44000, scoped, tag = 'output window, operand 0']
    %8 = vsyncpa [#allocation3], 0
    %s9 = scalar_lea.sflag [#allocation3], 1
    %10 = vsyncpa %s9, 0
    %11 = vsyncpa [#allocation6], 0
    %s12 = scalar_lea.sflag [#allocation6], 1
    %13 = vsyncpa %s12, 0
    %14 = vsyncpa [#allocation4], 0
    %s15 = scalar_lea.sflag [#allocation4], 1
    %16 = vsyncpa %s15, 0
    loop: start=0, step=1, limit=6
    $region2: #{stochastic_decoder_forward.1} parent=1 // loop_pre_header
      _
    $region3: #{stochastic_decoder_forward.1} parent=1 // loop_header
      %s18 = sphi 0, %s22
      %p19 = scmp.ge.s32.totalorder %s18, 6
      %s26 = sphi 0, %s26
      %s28 = sphi 0, %s26
      %s29 = sphi 0, %s28
      %s43 = sphi 0, %s29
      %s49 = sphi 0, %s51
      %s52 = sphi 0, %s49
      %s53 = sphi 0, %s52
      %s69 = sphi 0, %s53
      %s75 = sphi 0, %s77
      %s78 = sphi 0, %s75
      %s79 = sphi 0, %s78
      %s95 = sphi 0, %s79
      %s101 = sphi 0, %s103
      %s104 = sphi 0, %s101
      %s105 = sphi 0, %s104
      %s121 = sphi 0, %s105
    $region4: #{stochastic_decoder_forward.1} parent=1 // loop_header_branch
      %21 = sbr.rel (%p19) target = $region8
    $region5: #{stochastic_decoder_forward.1} parent=1 // loop_body
      %s23 = ssub.s32 %s18, 1
      %s24 = ssub.s32 %s18, 2
      %s25 = sadd.s32 %s18, 1
      %s27 = sadd.s32 %s26, 1
      %p30 = scmp.eq.s32.totalorder %s18, 3
      %p31 = scmp.ne.s32.totalorder %s26, %s28
      %p32 = scmp.eq.s32.totalorder %s18, 0
      %p33 = por %p31, %p32
      %p34 = scmp.ne.s32.totalorder %s26, %s28
      %p35 = scmp.eq.s32.totalorder %s23, 3
      %p36 = por %p34, %p35
      %p37 = scmp.ne.s32.totalorder %s28, %s29
      %p38 = scmp.eq.s32.totalorder %s23, 0
      %p39 = por %p37, %p38
      %p40 = scmp.ne.s32.totalorder %s28, %s29
      %p41 = scmp.eq.s32.totalorder %s24, 3
      %p42 = por %p40, %p41
      %p44 = scmp.ne.s32.totalorder %s29, %s43
      %p45 = scmp.eq.s32.totalorder %s24, 0
      %p46 = por %p44, %p45
      %s47 = ssub.s32 %s18, %s25
      %p48 = scmp.eq.s32.totalorder %s47, 0
      %s50 = sadd.s32 %s49, 1
      %s51 = scalar_select %p48, %s49, %s50
      %p54 = pneg %p48
      %p55 = scmp.eq.s32.totalorder %s18, 3
      %p56 = por %p54, %p55
      %p57 = scmp.ne.s32.totalorder %s49, %s52
      %p58 = scmp.eq.s32.totalorder %s18, 0
      %p59 = por %p57, %p58
      %p60 = scmp.ne.s32.totalorder %s49, %s52
      %p61 = scmp.eq.s32.totalorder %s23, 3
      %p62 = por %p60, %p61
      %p63 = scmp.ne.s32.totalorder %s52, %s53
      %p64 = scmp.eq.s32.totalorder %s23, 0
      %p65 = por %p63, %p64
      %p66 = scmp.ne.s32.totalorder %s52, %s53
      %p67 = scmp.eq.s32.totalorder %s24, 3
      %p68 = por %p66, %p67
      %p70 = scmp.ne.s32.totalorder %s53, %s69
      %p71 = scmp.eq.s32.totalorder %s24, 0
      %p72 = por %p70, %p71
      %s73 = ssub.s32 %s18, %s25
      %p74 = scmp.eq.s32.totalorder %s73, 0
      %s76 = sadd.s32 %s75, 1
      %s77 = scalar_select %p74, %s75, %s76
      %p80 = pneg %p74
      %p81 = scmp.eq.s32.totalorder %s18, 3
      %p82 = por %p80, %p81
      %p83 = scmp.ne.s32.totalorder %s75, %s78
      %p84 = scmp.eq.s32.totalorder %s18, 0
      %p85 = por %p83, %p84
      %p86 = scmp.ne.s32.totalorder %s75, %s78
      %p87 = scmp.eq.s32.totalorder %s23, 3
      %p88 = por %p86, %p87
      %p89 = scmp.ne.s32.totalorder %s78, %s79
      %p90 = scmp.eq.s32.totalorder %s23, 0
      %p91 = por %p89, %p90
      %p92 = scmp.ne.s32.totalorder %s78, %s79
      %p93 = scmp.eq.s32.totalorder %s24, 3
      %p94 = por %p92, %p93
      %p96 = scmp.ne.s32.totalorder %s79, %s95
      %p97 = scmp.eq.s32.totalorder %s24, 0
      %p98 = por %p96, %p97
      %s99 = ssub.s32 %s18, %s25
      %p100 = scmp.eq.s32.totalorder %s99, 0
      %s102 = sadd.s32 %s101, 1
      %s103 = scalar_select %p100, %s101, %s102
      %p106 = pneg %p100
      %p107 = scmp.eq.s32.totalorder %s18, 3
      %p108 = por %p106, %p107
      %p109 = scmp.ne.s32.totalorder %s101, %s104
      %p110 = scmp.eq.s32.totalorder %s18, 0
      %p111 = por %p109, %p110
      %p112 = scmp.ne.s32.totalorder %s101, %s104
      %p113 = scmp.eq.s32.totalorder %s23, 3
      %p114 = por %p112, %p113
      %p115 = scmp.ne.s32.totalorder %s104, %s105
      %p116 = scmp.eq.s32.totalorder %s23, 0
      %p117 = por %p115, %p116
      %p118 = scmp.ne.s32.totalorder %s104, %s105
      %p119 = scmp.eq.s32.totalorder %s24, 3
      %p120 = por %p118, %p119
      %p122 = scmp.ne.s32.totalorder %s105, %s121
      %p123 = scmp.eq.s32.totalorder %s24, 0
      %p124 = por %p122, %p123
      %p125 = scmp.le.s32.totalorder 1, %s18
      %p126 = scmp.lt.s32.totalorder %s18, 5
      %p127 = pnand %p125, %p126
      %p128 = pneg %p127
      // Predicated region
      $region9: #{stochastic_decoder_forward.1} parent=5 // pred_check
        _
      $region10: #{stochastic_decoder_forward.1} parent=5 // pred_check_branch
        %130 = sbr.rel (%p127) target = $region12
      $region11: #{stochastic_decoder_forward.1} parent=5 // pred_region
        %s131 = ssub.s32 %s18, 1
        // Predicated region
        $region13: #{stochastic_decoder_forward.1} parent=11 // pred_check
          %p132 = pneg %p39
        $region14: #{stochastic_decoder_forward.1} parent=11 // pred_check_branch
          %134 = sbr.rel (%p132) target = $region16
        $region15: #{stochastic_decoder_forward.1} parent=11 // pred_region
          _
        $region16: #{stochastic_decoder_forward.1} parent=11 // pred_fallthru
          _
      $region12: #{stochastic_decoder_forward.1} parent=5 // pred_fallthru
        _
      %p135 = scmp.lt.s32.totalorder %s18, 4
      // Predicated region
      $region17: #{stochastic_decoder_forward.1} parent=5 // pred_check
        %p136 = pneg %p135
      $region18: #{stochastic_decoder_forward.1} parent=5 // pred_check_branch
        %138 = sbr.rel (%p136) target = $region20
      $region19: #{stochastic_decoder_forward.1} parent=5 // pred_region
        // Predicated region
        $region21: #{stochastic_decoder_forward.1} parent=19 // pred_check
          %p139 = pneg %p59
        $region22: #{stochastic_decoder_forward.1} parent=19 // pred_check_branch
          %141 = sbr.rel (%p139) target = $region24
        $region23: #{stochastic_decoder_forward.1} parent=19 // pred_region
          %s142 = sand.u32 %s49, 1
          %s143 = scalar_lea.sflag [#allocation3], %s142
          %s144 = sand.u32 %s49, 1
          %s145 = smul.addr %s144, 544
          %s146 = scalar_lea.vmem [#allocation2], %s145
          %s147 = smul.u32 17, %s18
          %s149 = ssub.s32 8704, 8704
          %150 = vsyncadd %s143, %s149
          %s151 = smul.addr %s147, 128
          %s152 = scalar_lea.hbm %s1, %s151
          %s153 = sshll.u32 %s146, 4
          %s154 = int_to_ptr.vmem [resolvable:$true] %s153
          %159 = dma.hbm_to_vmem [thread:$0]  %s152, 8704, %s154, %s143, 8704, 2176, 136
        $region24: #{stochastic_decoder_forward.1} parent=19 // pred_fallthru
          _
        // Predicated region
        $region25: #{stochastic_decoder_forward.1} parent=19 // pred_check
          %p160 = pneg %p85
        $region26: #{stochastic_decoder_forward.1} parent=19 // pred_check_branch
          %162 = sbr.rel (%p160) target = $region28
        $region27: #{stochastic_decoder_forward.1} parent=19 // pred_region
          %s163 = sand.u32 %s75, 1
          %s164 = scalar_lea.sflag [#allocation6], %s163
          %s165 = sand.u32 %s75, 1
          %s166 = smul.addr %s165, 17
          %s167 = scalar_lea.vmem [#allocation5], %s166
          %s168 = smul.u32 17, %s18
          %s170 = ssub.s32 272, 272
          %171 = vsyncadd %s164, %s170
          %s172 = smul.addr %s168, 16
          %s173 = scalar_lea.hbm %s2, %s172
          %s175 = sshll.u32 %s167, 4
          %s176 = int_to_ptr.vmem [resolvable:$true] %s175
          %178 = dma.hbm_to_vmem [thread:$0]  %s173, 272, %s176, %s164
        $region28: #{stochastic_decoder_forward.1} parent=19 // pred_fallthru
          _
      $region20: #{stochastic_decoder_forward.1} parent=5 // pred_fallthru
        _
      %p179 = scmp.le.s32.totalorder 1, %s18
      %p180 = scmp.lt.s32.totalorder %s18, 5
      %p181 = pnand %p179, %p180
      %p182 = pneg %p181
      // Predicated region
      $region29: #{stochastic_decoder_forward.1} parent=5 // pred_check
        _
      $region30: #{stochastic_decoder_forward.1} parent=5 // pred_check_branch
        %184 = sbr.rel (%p181) target = $region32
      $region31: #{stochastic_decoder_forward.1} parent=5 // pred_region
        %s185 = ssub.s32 %s18, 1
        %s186 = sand.u32 %s52, 1
        %s187 = scalar_lea.sflag [#allocation3], %s186
        %s188 = sand.u32 %s52, 1
        %s189 = smul.addr %s188, 544
        %s190 = scalar_lea.vmem [#allocation2], %s189
        // Predicated region
        $region33: #{stochastic_decoder_forward.1} parent=31 // pred_check
          %p191 = pneg %p65
        $region34: #{stochastic_decoder_forward.1} parent=31 // pred_check_branch
          %193 = sbr.rel (%p191) target = $region36
        $region35: #{stochastic_decoder_forward.1} parent=31 // pred_region
          %194 = dma.done %s187, 8704
        $region36: #{stochastic_decoder_forward.1} parent=31 // pred_fallthru
          _
        %s195 = sand.u32 %s78, 1
        %s196 = scalar_lea.sflag [#allocation6], %s195
        %s197 = sand.u32 %s78, 1
        %s198 = smul.addr %s197, 17
        %s199 = scalar_lea.vmem [#allocation5], %s198
        // Predicated region
        $region37: #{stochastic_decoder_forward.1} parent=31 // pred_check
          %p200 = pneg %p91
        $region38: #{stochastic_decoder_forward.1} parent=31 // pred_check_branch
          %202 = sbr.rel (%p200) target = $region40
        $region39: #{stochastic_decoder_forward.1} parent=31 // pred_region
          %203 = dma.done %s196, 272
        $region40: #{stochastic_decoder_forward.1} parent=31 // pred_fallthru
          _
        %p204 = pneg %p39
        %p205 = pneg %p36
        %s206 = sand.u32 %s52, 1
        %s207 = scalar_lea.sflag [#allocation3], %s206
        %s208 = sand.u32 %s52, 1
        %s209 = smul.addr %s208, 544
        %s210 = scalar_lea.vmem [#allocation2], %s209
        %p211 = pneg %p65
        %p212 = pneg %p62
        %s213 = sand.u32 %s78, 1
        %s214 = scalar_lea.sflag [#allocation6], %s213
        %s215 = sand.u32 %s78, 1
        %s216 = smul.addr %s215, 17
        %s217 = scalar_lea.vmem [#allocation5], %s216
        %p218 = pneg %p91
        %p219 = pneg %p88
        %p220 = pneg %p117
        %p221 = pneg %p114
        %s222 = sand.u32 %s104, 1
        %s223 = scalar_lea.sflag [#allocation4], %s222
        %s224 = sand.u32 %s104, 1
        %s225 = smul.addr %s224, 272
        %s226 = scalar_lea.vmem [#allocation7], %s225
        %s227 = smul.u32 17, %s23
        %s228 = smul.u32 17, %s23
        %s229 = smul.u32 17, %s23
        %s230 = ssub.s32 65, %s229
        %p231 = scmp.lt.s32.totalorder %s230, 17
        %s232 = scalar_select %p231, %s230, 17
        %s233 = smul.u32 256, %s232
        %v235 = vld [vmem:[%s190] sm:$0xff]
        %v236 = vld [vmem:[%s190 + $0x8] sm:$0xff]
        %v237 = vld [vmem:[%s190 + $0x10] sm:$0xff]
        %v238 = vld [vmem:[%s190 + $0x18] sm:$0xff]
        %v239 = vld [vmem:[%s190 + $0x20] sm:$0xff]
        %v240 = vld [vmem:[%s190 + $0x28] sm:$0xff]
        %v241 = vld [vmem:[%s190 + $0x30] sm:$0xff]
        %v242 = vld [vmem:[%s190 + $0x38] sm:$0xff]
        %v243 = vld [vmem:[%s190 + $0x40] sm:$0xff]
        %v244 = vld [vmem:[%s190 + $0x48] sm:$0xff]
        %v245 = vld [vmem:[%s190 + $0x50] sm:$0xff]
        %v246 = vld [vmem:[%s190 + $0x58] sm:$0xff]
        %v247 = vld [vmem:[%s190 + $0x60] sm:$0xff]
        %v248 = vld [vmem:[%s190 + $0x68] sm:$0xff]
        %v249 = vld [vmem:[%s190 + $0x70] sm:$0xff]
        %v250 = vld [vmem:[%s190 + $0x78] sm:$0xff]
        %v251 = vld [vmem:[%s190 + $0x80] sm:$0xff]
        %v252 = vld [vmem:[%s190 + $0x88] sm:$0xff]
        %v253 = vld [vmem:[%s190 + $0x90] sm:$0xff]
        %v254 = vld [vmem:[%s190 + $0x98] sm:$0xff]
        %v255 = vld [vmem:[%s190 + $0xa0] sm:$0xff]
        %v256 = vld [vmem:[%s190 + $0xa8] sm:$0xff]
        %v257 = vld [vmem:[%s190 + $0xb0] sm:$0xff]
        %v258 = vld [vmem:[%s190 + $0xb8] sm:$0xff]
        %v259 = vld [vmem:[%s190 + $0xc0] sm:$0xff]
        %v260 = vld [vmem:[%s190 + $0xc8] sm:$0xff]
        %v261 = vld [vmem:[%s190 + $0xd0] sm:$0xff]
        %v262 = vld [vmem:[%s190 + $0xd8] sm:$0xff]
        %v263 = vld [vmem:[%s190 + $0xe0] sm:$0xff]
        %v264 = vld [vmem:[%s190 + $0xe8] sm:$0xff]
        %v265 = vld [vmem:[%s190 + $0xf0] sm:$0xff]
        %v266 = vld [vmem:[%s190 + $0xf8] sm:$0xff]
        %v267 = vld [vmem:[%s190 + $0x100] sm:$0xff]
        %v268 = vld [vmem:[%s190 + $0x108] sm:$0xff]
        %v269 = vld [vmem:[%s190 + $0x110] sm:$0xff]
        %v270 = vld [vmem:[%s190 + $0x118] sm:$0xff]
        %v271 = vld [vmem:[%s190 + $0x120] sm:$0xff]
        %v272 = vld [vmem:[%s190 + $0x128] sm:$0xff]
        %v273 = vld [vmem:[%s190 + $0x130] sm:$0xff]
        %v274 = vld [vmem:[%s190 + $0x138] sm:$0xff]
        %v275 = vld [vmem:[%s190 + $0x140] sm:$0xff]
        %v276 = vld [vmem:[%s190 + $0x148] sm:$0xff]
        %v277 = vld [vmem:[%s190 + $0x150] sm:$0xff]
        %v278 = vld [vmem:[%s190 + $0x158] sm:$0xff]
        %v279 = vld [vmem:[%s190 + $0x160] sm:$0xff]
        %v280 = vld [vmem:[%s190 + $0x168] sm:$0xff]
        %v281 = vld [vmem:[%s190 + $0x170] sm:$0xff]
        %v282 = vld [vmem:[%s190 + $0x178] sm:$0xff]
        %v283 = vld [vmem:[%s190 + $0x180] sm:$0xff]
        %v284 = vld [vmem:[%s190 + $0x188] sm:$0xff]
        %v285 = vld [vmem:[%s190 + $0x190] sm:$0xff]
        %v286 = vld [vmem:[%s190 + $0x198] sm:$0xff]
        %v287 = vld [vmem:[%s190 + $0x1a0] sm:$0xff]
        %v288 = vld [vmem:[%s190 + $0x1a8] sm:$0xff]
        %v289 = vld [vmem:[%s190 + $0x1b0] sm:$0xff]
        %v290 = vld [vmem:[%s190 + $0x1b8] sm:$0xff]
        %v291 = vld [vmem:[%s190 + $0x1c0] sm:$0xff]
        %v292 = vld [vmem:[%s190 + $0x1c8] sm:$0xff]
        %v293 = vld [vmem:[%s190 + $0x1d0] sm:$0xff]
        %v294 = vld [vmem:[%s190 + $0x1d8] sm:$0xff]
        %v295 = vld [vmem:[%s190 + $0x1e0] sm:$0xff]
        %v296 = vld [vmem:[%s190 + $0x1e8] sm:$0xff]
        %v297 = vld [vmem:[%s190 + $0x1f0] sm:$0xff]
        %v298 = vld [vmem:[%s190 + $0x1f8] sm:$0xff]
        %v299 = vld [vmem:[%s190 + $0x200] sm:$0xff]
        %v300 = vld [vmem:[%s190 + $0x208] sm:$0xff]
        %v301 = vld [vmem:[%s190 + $0x210] sm:$0xff]
        %v302 = vld [vmem:[%s190 + $0x218] sm:$0xff]
        %v303 = vunpack.c.l.s8.bf16 %v235
        %v304 = vunpack.c.l.s8.bf16 %v236
        %v305 = vunpack.c.l.s8.bf16 %v237
        %v306 = vunpack.c.l.s8.bf16 %v238
        %v307 = vunpack.c.l.s8.bf16 %v239
        %v308 = vunpack.c.l.s8.bf16 %v240
        %v309 = vunpack.c.l.s8.bf16 %v241
        %v310 = vunpack.c.l.s8.bf16 %v242
        %v311 = vunpack.c.l.s8.bf16 %v243
        %v312 = vunpack.c.l.s8.bf16 %v244
        %v313 = vunpack.c.l.s8.bf16 %v245
        %v314 = vunpack.c.l.s8.bf16 %v246
        %v315 = vunpack.c.l.s8.bf16 %v247
        %v316 = vunpack.c.l.s8.bf16 %v248
        %v317 = vunpack.c.l.s8.bf16 %v249
        %v318 = vunpack.c.l.s8.bf16 %v250
        %v319 = vunpack.c.l.s8.bf16 %v251
        %v320 = vunpack.c.h.s8.bf16 %v235
        %v321 = vunpack.c.h.s8.bf16 %v236
        %v322 = vunpack.c.h.s8.bf16 %v237
        %v323 = vunpack.c.h.s8.bf16 %v238
        %v324 = vunpack.c.h.s8.bf16 %v239
        %v325 = vunpack.c.h.s8.bf16 %v240
        %v326 = vunpack.c.h.s8.bf16 %v241
        %v327 = vunpack.c.h.s8.bf16 %v242
        %v328 = vunpack.c.h.s8.bf16 %v243
        %v329 = vunpack.c.h.s8.bf16 %v244
        %v330 = vunpack.c.h.s8.bf16 %v245
        %v331 = vunpack.c.h.s8.bf16 %v246
        %v332 = vunpack.c.h.s8.bf16 %v247
        %v333 = vunpack.c.h.s8.bf16 %v248
        %v334 = vunpack.c.h.s8.bf16 %v249
        %v335 = vunpack.c.h.s8.bf16 %v250
        %v336 = vunpack.c.h.s8.bf16 %v251
        %v337 = vunpack.c.l.s8.bf16 %v252
        %v338 = vunpack.c.l.s8.bf16 %v253
        %v339 = vunpack.c.l.s8.bf16 %v254
        %v340 = vunpack.c.l.s8.bf16 %v255
        %v341 = vunpack.c.l.s8.bf16 %v256
        %v342 = vunpack.c.l.s8.bf16 %v257
        %v343 = vunpack.c.l.s8.bf16 %v258
        %v344 = vunpack.c.l.s8.bf16 %v259
        %v345 = vunpack.c.l.s8.bf16 %v260
        %v346 = vunpack.c.l.s8.bf16 %v261
        %v347 = vunpack.c.l.s8.bf16 %v262
        %v348 = vunpack.c.l.s8.bf16 %v263
        %v349 = vunpack.c.l.s8.bf16 %v264
        %v350 = vunpack.c.l.s8.bf16 %v265
        %v351 = vunpack.c.l.s8.bf16 %v266
        %v352 = vunpack.c.l.s8.bf16 %v267
        %v353 = vunpack.c.l.s8.bf16 %v268
        %v354 = vunpack.c.h.s8.bf16 %v252
        %v355 = vunpack.c.h.s8.bf16 %v253
        %v356 = vunpack.c.h.s8.bf16 %v254
        %v357 = vunpack.c.h.s8.bf16 %v255
        %v358 = vunpack.c.h.s8.bf16 %v256
        %v359 = vunpack.c.h.s8.bf16 %v257
        %v360 = vunpack.c.h.s8.bf16 %v258
        %v361 = vunpack.c.h.s8.bf16 %v259
        %v362 = vunpack.c.h.s8.bf16 %v260
        %v363 = vunpack.c.h.s8.bf16 %v261
        %v364 = vunpack.c.h.s8.bf16 %v262
        %v365 = vunpack.c.h.s8.bf16 %v263
        %v366 = vunpack.c.h.s8.bf16 %v264
        %v367 = vunpack.c.h.s8.bf16 %v265
        %v368 = vunpack.c.h.s8.bf16 %v266
        %v369 = vunpack.c.h.s8.bf16 %v267
        %v370 = vunpack.c.h.s8.bf16 %v268
        %v371 = vunpack.c.l.s8.bf16 %v269
        %v372 = vunpack.c.l.s8.bf16 %v270
        %v373 = vunpack.c.l.s8.bf16 %v271
        %v374 = vunpack.c.l.s8.bf16 %v272
        %v375 = vunpack.c.l.s8.bf16 %v273
        %v376 = vunpack.c.l.s8.bf16 %v274
        %v377 = vunpack.c.l.s8.bf16 %v275
        %v378 = vunpack.c.l.s8.bf16 %v276
        %v379 = vunpack.c.l.s8.bf16 %v277
        %v380 = vunpack.c.l.s8.bf16 %v278
        %v381 = vunpack.c.l.s8.bf16 %v279
        %v382 = vunpack.c.l.s8.bf16 %v280
        %v383 = vunpack.c.l.s8.bf16 %v281
        %v384 = vunpack.c.l.s8.bf16 %v282
        %v385 = vunpack.c.l.s8.bf16 %v283
        %v386 = vunpack.c.l.s8.bf16 %v284
        %v387 = vunpack.c.l.s8.bf16 %v285
        %v388 = vunpack.c.h.s8.bf16 %v269
        %v389 = vunpack.c.h.s8.bf16 %v270
        %v390 = vunpack.c.h.s8.bf16 %v271
        %v391 = vunpack.c.h.s8.bf16 %v272
        %v392 = vunpack.c.h.s8.bf16 %v273
        %v393 = vunpack.c.h.s8.bf16 %v274
        %v394 = vunpack.c.h.s8.bf16 %v275
        %v395 = vunpack.c.h.s8.bf16 %v276
        %v396 = vunpack.c.h.s8.bf16 %v277
        %v397 = vunpack.c.h.s8.bf16 %v278
        %v398 = vunpack.c.h.s8.bf16 %v279
        %v399 = vunpack.c.h.s8.bf16 %v280
        %v400 = vunpack.c.h.s8.bf16 %v281
        %v401 = vunpack.c.h.s8.bf16 %v282
        %v402 = vunpack.c.h.s8.bf16 %v283
        %v403 = vunpack.c.h.s8.bf16 %v284
        %v404 = vunpack.c.h.s8.bf16 %v285
        %v405 = vunpack.c.l.s8.bf16 %v286
        %v406 = vunpack.c.l.s8.bf16 %v287
        %v407 = vunpack.c.l.s8.bf16 %v288
        %v408 = vunpack.c.l.s8.bf16 %v289
        %v409 = vunpack.c.l.s8.bf16 %v290
        %v410 = vunpack.c.l.s8.bf16 %v291
        %v411 = vunpack.c.l.s8.bf16 %v292
        %v412 = vunpack.c.l.s8.bf16 %v293
        %v413 = vunpack.c.l.s8.bf16 %v294
        %v414 = vunpack.c.l.s8.bf16 %v295
        %v415 = vunpack.c.l.s8.bf16 %v296
        %v416 = vunpack.c.l.s8.bf16 %v297
        %v417 = vunpack.c.l.s8.bf16 %v298
        %v418 = vunpack.c.l.s8.bf16 %v299
        %v419 = vunpack.c.l.s8.bf16 %v300
        %v420 = vunpack.c.l.s8.bf16 %v301
        %v421 = vunpack.c.l.s8.bf16 %v302
        %v422 = vunpack.c.h.s8.bf16 %v286
        %v423 = vunpack.c.h.s8.bf16 %v287
        %v424 = vunpack.c.h.s8.bf16 %v288
        %v425 = vunpack.c.h.s8.bf16 %v289
        %v426 = vunpack.c.h.s8.bf16 %v290
        %v427 = vunpack.c.h.s8.bf16 %v291
        %v428 = vunpack.c.h.s8.bf16 %v292
        %v429 = vunpack.c.h.s8.bf16 %v293
        %v430 = vunpack.c.h.s8.bf16 %v294
        %v431 = vunpack.c.h.s8.bf16 %v295
        %v432 = vunpack.c.h.s8.bf16 %v296
        %v433 = vunpack.c.h.s8.bf16 %v297
        %v434 = vunpack.c.h.s8.bf16 %v298
        %v435 = vunpack.c.h.s8.bf16 %v299
        %v436 = vunpack.c.h.s8.bf16 %v300
        %v437 = vunpack.c.h.s8.bf16 %v301
        %v438 = vunpack.c.h.s8.bf16 %v302
        %v439 = vld [vmem:[%s0] sm:$0xf]
        %v440 = vld [vmem:[%s0 + $0x4] sm:$0xf]
        %v441 = vld [vmem:[%s199] sm:$0xff]
        %v442 = vld [vmem:[%s199 + $0x8] sm:$0xff]
        %v443 = vld [vmem:[%s199 + $0x10] sm:$0x1]
        %v447 = vlaneseq
        %v448 = vshrl.u32 %v447, 7
        %v449 = vsub.s32 0, %v448
        %v450 = vrot.slane %v441, %v449
        %v451 = vlaneseq
        %v452 = vshrl.u32 %v451, 7
        %v453 = vsub.s32 1, %v452
        %v454 = vrot.slane %v441, %v453
        %v455 = vlaneseq
        %v456 = vshrl.u32 %v455, 7
        %v457 = vsub.s32 2, %v456
        %v458 = vrot.slane %v441, %v457
        %v459 = vlaneseq
        %v460 = vshrl.u32 %v459, 7
        %v461 = vsub.s32 3, %v460
        %v462 = vrot.slane %v441, %v461
        %v463 = vlaneseq
        %v464 = vshrl.u32 %v463, 7
        %v465 = vsub.s32 4, %v464
        %v466 = vrot.slane %v441, %v465
        %v467 = vlaneseq
        %v468 = vshrl.u32 %v467, 7
        %v469 = vsub.s32 5, %v468
        %v470 = vrot.slane %v441, %v469
        %v471 = vlaneseq
        %v472 = vshrl.u32 %v471, 7
        %v473 = vsub.s32 6, %v472
        %v474 = vrot.slane %v441, %v473
        %v475 = vlaneseq
        %v476 = vshrl.u32 %v475, 7
        %v477 = vsub.s32 7, %v476
        %v478 = vrot.slane %v441, %v477
        %v479 = vlaneseq
        %v480 = vshrl.u32 %v479, 7
        %v481 = vsub.s32 0, %v480
        %v482 = vrot.slane %v442, %v481
        %v483 = vlaneseq
        %v484 = vshrl.u32 %v483, 7
        %v485 = vsub.s32 1, %v484
        %v486 = vrot.slane %v442, %v485
        %v487 = vlaneseq
        %v488 = vshrl.u32 %v487, 7
        %v489 = vsub.s32 2, %v488
        %v490 = vrot.slane %v442, %v489
        %v491 = vlaneseq
        %v492 = vshrl.u32 %v491, 7
        %v493 = vsub.s32 3, %v492
        %v494 = vrot.slane %v442, %v493
        %v495 = vlaneseq
        %v496 = vshrl.u32 %v495, 7
        %v497 = vsub.s32 4, %v496
        %v498 = vrot.slane %v442, %v497
        %v499 = vlaneseq
        %v500 = vshrl.u32 %v499, 7
        %v501 = vsub.s32 5, %v500
        %v502 = vrot.slane %v442, %v501
        %v503 = vlaneseq
        %v504 = vshrl.u32 %v503, 7
        %v505 = vsub.s32 6, %v504
        %v506 = vrot.slane %v442, %v505
        %v507 = vlaneseq
        %v508 = vshrl.u32 %v507, 7
        %v509 = vsub.s32 7, %v508
        %v510 = vrot.slane %v442, %v509
        %v511 = vlaneseq
        %v512 = vshrl.u32 %v511, 7
        %v513 = vsub.s32 0, %v512
        %v514 = vrot.slane %v443, %v513
        %v534 = vunpack.c.l.b16 %v439
        %v535 = vunpack.c.l.b16 %v440
        %v536 = vpack.c.b16 %v535, %v534
        %538 = vmatprep.subr.bf16.mxu0 %v304
        %539 = vmatpush1.bf16.msra.mxu0 %v303
        %540 = vmatprep.subr.bf16.mxu0 %v321
        %541 = vmatpush1.bf16.msra.mxu0 %v320
        %542 = vmatprep.subr.bf16.mxu0 %v338
        %543 = vmatpush1.bf16.msra.mxu0 %v337
        %544 = vmatprep.subr.bf16.mxu0 %v355
        %545 = vmatpush1.bf16.msra.mxu0 %v354
        %546 = vmatprep.subr.bf16.mxu0 %v372
        %547 = vmatpush1.bf16.msra.mxu0 %v371
        %548 = vmatprep.subr.bf16.mxu0 %v389
        %549 = vmatpush1.bf16.msra.mxu0 %v388
        %550 = vmatprep.subr.bf16.mxu0 %v406
        %551 = vmatpush1.bf16.msra.mxu0 %v405
        %552 = vmatprep.subr.bf16.mxu0 %v423
        %553 = vmatpush1.bf16.msra.mxu0 %v422
        %554 = vmatprep.subr.bf16.mxu0 0
        %555 = vmatpush1.bf16.msra.mxu0 0
        %556 = vmatprep.subr.bf16.mxu0 0
        %557 = vmatpush1.bf16.msra.mxu0 0
        %558 = vmatprep.subr.bf16.mxu0 0
        %559 = vmatpush1.bf16.msra.mxu0 0
        %560 = vmatprep.subr.bf16.mxu0 0
        %561 = vmatpush1.bf16.msra.mxu0 0
        %562 = vmatprep.subr.bf16.mxu0 0
        %563 = vmatpush1.bf16.msra.mxu0 0
        %564 = vmatprep.subr.bf16.mxu0 0
        %565 = vmatpush1.bf16.msra.mxu0 0
        %566 = vmatprep.subr.bf16.mxu0 0
        %567 = vmatpush1.bf16.msra.mxu0 0
        %568 = vmatprep.subr.bf16.mxu0 0
        %569 = vmatpush1.bf16.msra.mxu0 0
        %570 = vmatprep.mubr.bf16.mxu0 0
        %571 = vmatmul.mubr.bf16.gmra.mrb[0].mxu0 %v536
        %v572 = vpop.f32.mrb[0].mxu0
        %v573 = vadd.f32 %v450, %v572
        %v574 = vpop.f32.mrb[0].mxu0
        %v575 = vadd.f32 %v454, %v574
        %v576 = vpop.f32.mrb[0].mxu0
        %v577 = vadd.f32 %v450, %v576
        %v578 = vpop.f32.mrb[0].mxu0
        %v579 = vadd.f32 %v454, %v578
        %580 = vdwg.mxu0
        %581 = vmatprep.subr.bf16.mxu0 %v306
        %582 = vmatpush1.bf16.msra.mxu0 %v305
        %583 = vmatprep.subr.bf16.mxu0 %v323
        %584 = vmatpush1.bf16.msra.mxu0 %v322
        %585 = vmatprep.subr.bf16.mxu0 %v340
        %586 = vmatpush1.bf16.msra.mxu0 %v339
        %587 = vmatprep.subr.bf16.mxu0 %v357
        %588 = vmatpush1.bf16.msra.mxu0 %v356
        %589 = vmatprep.subr.bf16.mxu0 %v374
        %590 = vmatpush1.bf16.msra.mxu0 %v373
        %591 = vmatprep.subr.bf16.mxu0 %v391
        %592 = vmatpush1.bf16.msra.mxu0 %v390
        %593 = vmatprep.subr.bf16.mxu0 %v408
        %594 = vmatpush1.bf16.msra.mxu0 %v407
        %595 = vmatprep.subr.bf16.mxu0 %v425
        %596 = vmatpush1.bf16.msra.mxu0 %v424
        %597 = vmatprep.subr.bf16.mxu0 0
        %598 = vmatpush1.bf16.msra.mxu0 0
        %599 = vmatprep.subr.bf16.mxu0 0
        %600 = vmatpush1.bf16.msra.mxu0 0
        %601 = vmatprep.subr.bf16.mxu0 0
        %602 = vmatpush1.bf16.msra.mxu0 0
        %603 = vmatprep.subr.bf16.mxu0 0
        %604 = vmatpush1.bf16.msra.mxu0 0
        %605 = vmatprep.subr.bf16.mxu0 0
        %606 = vmatpush1.bf16.msra.mxu0 0
        %607 = vmatprep.subr.bf16.mxu0 0
        %608 = vmatpush1.bf16.msra.mxu0 0
        %609 = vmatprep.subr.bf16.mxu0 0
        %610 = vmatpush1.bf16.msra.mxu0 0
        %611 = vmatprep.subr.bf16.mxu0 0
        %612 = vmatpush1.bf16.msra.mxu0 0
        %613 = vmatprep.mubr.bf16.mxu0 0
        %614 = vmatmul.mubr.bf16.gmra.mrb[0].mxu0 %v536
        %v615 = vpop.f32.mrb[0].mxu0
        %v616 = vadd.f32 %v458, %v615
        %v617 = vpop.f32.mrb[0].mxu0
        %v618 = vadd.f32 %v462, %v617
        %v619 = vpop.f32.mrb[0].mxu0
        %v620 = vadd.f32 %v458, %v619
        %v621 = vpop.f32.mrb[0].mxu0
        %v622 = vadd.f32 %v462, %v621
        %623 = vdwg.mxu0
        %624 = vmatprep.subr.bf16.mxu0 %v308
        %625 = vmatpush1.bf16.msra.mxu0 %v307
        %626 = vmatprep.subr.bf16.mxu0 %v325
        %627 = vmatpush1.bf16.msra.mxu0 %v324
        %628 = vmatprep.subr.bf16.mxu0 %v342
        %629 = vmatpush1.bf16.msra.mxu0 %v341
        %630 = vmatprep.subr.bf16.mxu0 %v359
        %631 = vmatpush1.bf16.msra.mxu0 %v358
        %632 = vmatprep.subr.bf16.mxu0 %v376
        %633 = vmatpush1.bf16.msra.mxu0 %v375
        %634 = vmatprep.subr.bf16.mxu0 %v393
        %635 = vmatpush1.bf16.msra.mxu0 %v392
        %636 = vmatprep.subr.bf16.mxu0 %v410
        %637 = vmatpush1.bf16.msra.mxu0 %v409
        %638 = vmatprep.subr.bf16.mxu0 %v427
        %639 = vmatpush1.bf16.msra.mxu0 %v426
        %640 = vmatprep.subr.bf16.mxu0 0
        %641 = vmatpush1.bf16.msra.mxu0 0
        %642 = vmatprep.subr.bf16.mxu0 0
        %643 = vmatpush1.bf16.msra.mxu0 0
        %644 = vmatprep.subr.bf16.mxu0 0
        %645 = vmatpush1.bf16.msra.mxu0 0
        %646 = vmatprep.subr.bf16.mxu0 0
        %647 = vmatpush1.bf16.msra.mxu0 0
        %648 = vmatprep.subr.bf16.mxu0 0
        %649 = vmatpush1.bf16.msra.mxu0 0
        %650 = vmatprep.subr.bf16.mxu0 0
        %651 = vmatpush1.bf16.msra.mxu0 0
        %652 = vmatprep.subr.bf16.mxu0 0
        %653 = vmatpush1.bf16.msra.mxu0 0
        %654 = vmatprep.subr.bf16.mxu0 0
        %655 = vmatpush1.bf16.msra.mxu0 0
        %656 = vmatprep.mubr.bf16.mxu0 0
        %657 = vmatmul.mubr.bf16.gmra.mrb[0].mxu0 %v536
        %v658 = vpop.f32.mrb[0].mxu0
        %v659 = vadd.f32 %v466, %v658
        %v660 = vpop.f32.mrb[0].mxu0
        %v661 = vadd.f32 %v470, %v660
        %v662 = vpop.f32.mrb[0].mxu0
        %v663 = vadd.f32 %v466, %v662
        %v664 = vpop.f32.mrb[0].mxu0
        %v665 = vadd.f32 %v470, %v664
        %666 = vdwg.mxu0
        %667 = vmatprep.subr.bf16.mxu0 %v310
        %668 = vmatpush1.bf16.msra.mxu0 %v309
        %669 = vmatprep.subr.bf16.mxu0 %v327
        %670 = vmatpush1.bf16.msra.mxu0 %v326
        %671 = vmatprep.subr.bf16.mxu0 %v344
        %672 = vmatpush1.bf16.msra.mxu0 %v343
        %673 = vmatprep.subr.bf16.mxu0 %v361
        %674 = vmatpush1.bf16.msra.mxu0 %v360
        %675 = vmatprep.subr.bf16.mxu0 %v378
        %676 = vmatpush1.bf16.msra.mxu0 %v377
        %677 = vmatprep.subr.bf16.mxu0 %v395
        %678 = vmatpush1.bf16.msra.mxu0 %v394
        %679 = vmatprep.subr.bf16.mxu0 %v412
        %680 = vmatpush1.bf16.msra.mxu0 %v411
        %681 = vmatprep.subr.bf16.mxu0 %v429
        %682 = vmatpush1.bf16.msra.mxu0 %v428
        %683 = vmatprep.subr.bf16.mxu0 0
        %684 = vmatpush1.bf16.msra.mxu0 0
        %685 = vmatprep.subr.bf16.mxu0 0
        %686 = vmatpush1.bf16.msra.mxu0 0
        %687 = vmatprep.subr.bf16.mxu0 0
        %688 = vmatpush1.bf16.msra.mxu0 0
        %689 = vmatprep.subr.bf16.mxu0 0
        %690 = vmatpush1.bf16.msra.mxu0 0
        %691 = vmatprep.subr.bf16.mxu0 0
        %692 = vmatpush1.bf16.msra.mxu0 0
        %693 = vmatprep.subr.bf16.mxu0 0
        %694 = vmatpush1.bf16.msra.mxu0 0
        %695 = vmatprep.subr.bf16.mxu0 0
        %696 = vmatpush1.bf16.msra.mxu0 0
        %697 = vmatprep.subr.bf16.mxu0 0
        %698 = vmatpush1.bf16.msra.mxu0 0
        %699 = vmatprep.mubr.bf16.mxu0 0
        %700 = vmatmul.mubr.bf16.gmra.mrb[0].mxu0 %v536
        %v701 = vpop.f32.mrb[0].mxu0
        %v702 = vadd.f32 %v474, %v701
        %v703 = vpop.f32.mrb[0].mxu0
        %v704 = vadd.f32 %v478, %v703
        %v705 = vpop.f32.mrb[0].mxu0
        %v706 = vadd.f32 %v474, %v705
        %v707 = vpop.f32.mrb[0].mxu0
        %v708 = vadd.f32 %v478, %v707
        %709 = vdwg.mxu0
        %710 = vmatprep.subr.bf16.mxu0 %v312
        %711 = vmatpush1.bf16.msra.mxu0 %v311
        %712 = vmatprep.subr.bf16.mxu0 %v329
        %713 = vmatpush1.bf16.msra.mxu0 %v328
        %714 = vmatprep.subr.bf16.mxu0 %v346
        %715 = vmatpush1.bf16.msra.mxu0 %v345
        %716 = vmatprep.subr.bf16.mxu0 %v363
        %717 = vmatpush1.bf16.msra.mxu0 %v362
        %718 = vmatprep.subr.bf16.mxu0 %v380
        %719 = vmatpush1.bf16.msra.mxu0 %v379
        %720 = vmatprep.subr.bf16.mxu0 %v397
        %721 = vmatpush1.bf16.msra.mxu0 %v396
        %722 = vmatprep.subr.bf16.mxu0 %v414
        %723 = vmatpush1.bf16.msra.mxu0 %v413
        %724 = vmatprep.subr.bf16.mxu0 %v431
        %725 = vmatpush1.bf16.msra.mxu0 %v430
        %726 = vmatprep.subr.bf16.mxu0 0
        %727 = vmatpush1.bf16.msra.mxu0 0
        %728 = vmatprep.subr.bf16.mxu0 0
        %729 = vmatpush1.bf16.msra.mxu0 0
        %730 = vmatprep.subr.bf16.mxu0 0
        %731 = vmatpush1.bf16.msra.mxu0 0
        %732 = vmatprep.subr.bf16.mxu0 0
        %733 = vmatpush1.bf16.msra.mxu0 0
        %734 = vmatprep.subr.bf16.mxu0 0
        %735 = vmatpush1.bf16.msra.mxu0 0
        %736 = vmatprep.subr.bf16.mxu0 0
        %737 = vmatpush1.bf16.msra.mxu0 0
        %738 = vmatprep.subr.bf16.mxu0 0
        %739 = vmatpush1.bf16.msra.mxu0 0
        %740 = vmatprep.subr.bf16.mxu0 0
        %741 = vmatpush1.bf16.msra.mxu0 0
        %742 = vmatprep.mubr.bf16.mxu0 0
        %743 = vmatmul.mubr.bf16.gmra.mrb[0].mxu0 %v536
        %v744 = vpop.f32.mrb[0].mxu0
        %v745 = vadd.f32 %v482, %v744
        %v746 = vpop.f32.mrb[0].mxu0
        %v747 = vadd.f32 %v486, %v746
        %v748 = vpop.f32.mrb[0].mxu0
        %v749 = vadd.f32 %v482, %v748
        %v750 = vpop.f32.mrb[0].mxu0
        %v751 = vadd.f32 %v486, %v750
        %752 = vdwg.mxu0
        %753 = vmatprep.subr.bf16.mxu0 %v314
        %754 = vmatpush1.bf16.msra.mxu0 %v313
        %755 = vmatprep.subr.bf16.mxu0 %v331
        %756 = vmatpush1.bf16.msra.mxu0 %v330
        %757 = vmatprep.subr.bf16.mxu0 %v348
        %758 = vmatpush1.bf16.msra.mxu0 %v347
        %759 = vmatprep.subr.bf16.mxu0 %v365
        %760 = vmatpush1.bf16.msra.mxu0 %v364
        %761 = vmatprep.subr.bf16.mxu0 %v382
        %762 = vmatpush1.bf16.msra.mxu0 %v381
        %763 = vmatprep.subr.bf16.mxu0 %v399
        %764 = vmatpush1.bf16.msra.mxu0 %v398
        %765 = vmatprep.subr.bf16.mxu0 %v416
        %766 = vmatpush1.bf16.msra.mxu0 %v415
        %767 = vmatprep.subr.bf16.mxu0 %v433
        %768 = vmatpush1.bf16.msra.mxu0 %v432
        %769 = vmatprep.subr.bf16.mxu0 0
        %770 = vmatpush1.bf16.msra.mxu0 0
        %771 = vmatprep.subr.bf16.mxu0 0
        %772 = vmatpush1.bf16.msra.mxu0 0
        %773 = vmatprep.subr.bf16.mxu0 0
        %774 = vmatpush1.bf16.msra.mxu0 0
        %775 = vmatprep.subr.bf16.mxu0 0
        %776 = vmatpush1.bf16.msra.mxu0 0
        %777 = vmatprep.subr.bf16.mxu0 0
        %778 = vmatpush1.bf16.msra.mxu0 0
        %779 = vmatprep.subr.bf16.mxu0 0
        %780 = vmatpush1.bf16.msra.mxu0 0
        %781 = vmatprep.subr.bf16.mxu0 0
        %782 = vmatpush1.bf16.msra.mxu0 0
        %783 = vmatprep.subr.bf16.mxu0 0
        %784 = vmatpush1.bf16.msra.mxu0 0
        %785 = vmatprep.mubr.bf16.mxu0 0
        %786 = vmatmul.mubr.bf16.gmra.mrb[0].mxu0 %v536
        %v787 = vpop.f32.mrb[0].mxu0
        %v788 = vadd.f32 %v490, %v787
        %v789 = vpop.f32.mrb[0].mxu0
        %v790 = vadd.f32 %v494, %v789
        %v791 = vpop.f32.mrb[0].mxu0
        %v792 = vadd.f32 %v490, %v791
        %v793 = vpop.f32.mrb[0].mxu0
        %v794 = vadd.f32 %v494, %v793
        %795 = vdwg.mxu0
        %796 = vmatprep.subr.bf16.mxu0 %v316
        %797 = vmatpush1.bf16.msra.mxu0 %v315
        %798 = vmatprep.subr.bf16.mxu0 %v333
        %799 = vmatpush1.bf16.msra.mxu0 %v332
        %800 = vmatprep.subr.bf16.mxu0 %v350
        %801 = vmatpush1.bf16.msra.mxu0 %v349
        %802 = vmatprep.subr.bf16.mxu0 %v367
        %803 = vmatpush1.bf16.msra.mxu0 %v366
        %804 = vmatprep.subr.bf16.mxu0 %v384
        %805 = vmatpush1.bf16.msra.mxu0 %v383
        %806 = vmatprep.subr.bf16.mxu0 %v401
        %807 = vmatpush1.bf16.msra.mxu0 %v400
        %808 = vmatprep.subr.bf16.mxu0 %v418
        %809 = vmatpush1.bf16.msra.mxu0 %v417
        %810 = vmatprep.subr.bf16.mxu0 %v435
        %811 = vmatpush1.bf16.msra.mxu0 %v434
        %812 = vmatprep.subr.bf16.mxu0 0
        %813 = vmatpush1.bf16.msra.mxu0 0
        %814 = vmatprep.subr.bf16.mxu0 0
        %815 = vmatpush1.bf16.msra.mxu0 0
        %816 = vmatprep.subr.bf16.mxu0 0
        %817 = vmatpush1.bf16.msra.mxu0 0
        %818 = vmatprep.subr.bf16.mxu0 0
        %819 = vmatpush1.bf16.msra.mxu0 0
        %820 = vmatprep.subr.bf16.mxu0 0
        %821 = vmatpush1.bf16.msra.mxu0 0
        %822 = vmatprep.subr.bf16.mxu0 0
        %823 = vmatpush1.bf16.msra.mxu0 0
        %824 = vmatprep.subr.bf16.mxu0 0
        %825 = vmatpush1.bf16.msra.mxu0 0
        %826 = vmatprep.subr.bf16.mxu0 0
        %827 = vmatpush1.bf16.msra.mxu0 0
        %828 = vmatprep.mubr.bf16.mxu0 0
        %829 = vmatmul.mubr.bf16.gmra.mrb[0].mxu0 %v536
        %v830 = vpop.f32.mrb[0].mxu0
        %v831 = vadd.f32 %v498, %v830
        %v832 = vpop.f32.mrb[0].mxu0
        %v833 = vadd.f32 %v502, %v832
        %v834 = vpop.f32.mrb[0].mxu0
        %v835 = vadd.f32 %v498, %v834
        %v836 = vpop.f32.mrb[0].mxu0
        %v837 = vadd.f32 %v502, %v836
        %838 = vdwg.mxu0
        %839 = vmatprep.subr.bf16.mxu0 %v318
        %840 = vmatpush1.bf16.msra.mxu0 %v317
        %841 = vmatprep.subr.bf16.mxu0 %v335
        %842 = vmatpush1.bf16.msra.mxu0 %v334
        %843 = vmatprep.subr.bf16.mxu0 %v352
        %844 = vmatpush1.bf16.msra.mxu0 %v351
        %845 = vmatprep.subr.bf16.mxu0 %v369
        %846 = vmatpush1.bf16.msra.mxu0 %v368
        %847 = vmatprep.subr.bf16.mxu0 %v386
        %848 = vmatpush1.bf16.msra.mxu0 %v385
        %849 = vmatprep.subr.bf16.mxu0 %v403
        %850 = vmatpush1.bf16.msra.mxu0 %v402
        %851 = vmatprep.subr.bf16.mxu0 %v420
        %852 = vmatpush1.bf16.msra.mxu0 %v419
        %853 = vmatprep.subr.bf16.mxu0 %v437
        %854 = vmatpush1.bf16.msra.mxu0 %v436
        %855 = vmatprep.subr.bf16.mxu0 0
        %856 = vmatpush1.bf16.msra.mxu0 0
        %857 = vmatprep.subr.bf16.mxu0 0
        %858 = vmatpush1.bf16.msra.mxu0 0
        %859 = vmatprep.subr.bf16.mxu0 0
        %860 = vmatpush1.bf16.msra.mxu0 0
        %861 = vmatprep.subr.bf16.mxu0 0
        %862 = vmatpush1.bf16.msra.mxu0 0
        %863 = vmatprep.subr.bf16.mxu0 0
        %864 = vmatpush1.bf16.msra.mxu0 0
        %865 = vmatprep.subr.bf16.mxu0 0
        %866 = vmatpush1.bf16.msra.mxu0 0
        %867 = vmatprep.subr.bf16.mxu0 0
        %868 = vmatpush1.bf16.msra.mxu0 0
        %869 = vmatprep.subr.bf16.mxu0 0
        %870 = vmatpush1.bf16.msra.mxu0 0
        %871 = vmatprep.mubr.bf16.mxu0 0
        %872 = vmatmul.mubr.bf16.gmra.mrb[0].mxu0 %v536
        %v873 = vpop.f32.mrb[0].mxu0
        %v874 = vadd.f32 %v506, %v873
        %v875 = vpop.f32.mrb[0].mxu0
        %v876 = vadd.f32 %v510, %v875
        %v877 = vpop.f32.mrb[0].mxu0
        %v878 = vadd.f32 %v506, %v877
        %v879 = vpop.f32.mrb[0].mxu0
        %v880 = vadd.f32 %v510, %v879
        %881 = vdwg.mxu0
        %882 = vmatprep.subr.bf16.mxu0 0
        %883 = vmatpush1.bf16.msra.mxu0 %v319
        %884 = vmatprep.subr.bf16.mxu0 0
        %885 = vmatpush1.bf16.msra.mxu0 %v336
        %886 = vmatprep.subr.bf16.mxu0 0
        %887 = vmatpush1.bf16.msra.mxu0 %v353
        %888 = vmatprep.subr.bf16.mxu0 0
        %889 = vmatpush1.bf16.msra.mxu0 %v370
        %890 = vmatprep.subr.bf16.mxu0 0
        %891 = vmatpush1.bf16.msra.mxu0 %v387
        %892 = vmatprep.subr.bf16.mxu0 0
        %893 = vmatpush1.bf16.msra.mxu0 %v404
        %894 = vmatprep.subr.bf16.mxu0 0
        %895 = vmatpush1.bf16.msra.mxu0 %v421
        %896 = vmatprep.subr.bf16.mxu0 0
        %897 = vmatpush1.bf16.msra.mxu0 %v438
        %898 = vmatprep.subr.bf16.mxu0 0
        %899 = vmatpush1.bf16.msra.mxu0 0
        %900 = vmatprep.subr.bf16.mxu0 0
        %901 = vmatpush1.bf16.msra.mxu0 0
        %902 = vmatprep.subr.bf16.mxu0 0
        %903 = vmatpush1.bf16.msra.mxu0 0
        %904 = vmatprep.subr.bf16.mxu0 0
        %905 = vmatpush1.bf16.msra.mxu0 0
        %906 = vmatprep.subr.bf16.mxu0 0
        %907 = vmatpush1.bf16.msra.mxu0 0
        %908 = vmatprep.subr.bf16.mxu0 0
        %909 = vmatpush1.bf16.msra.mxu0 0
        %910 = vmatprep.subr.bf16.mxu0 0
        %911 = vmatpush1.bf16.msra.mxu0 0
        %912 = vmatprep.subr.bf16.mxu0 0
        %913 = vmatpush1.bf16.msra.mxu0 0
        %914 = vmatprep.mubr.bf16.mxu0 0
        %915 = vmatmul.mubr.bf16.gmra.mrb[0].mxu0 %v536
        %v916 = vpop.f32.mrb[0].mxu0
        %v917 = vadd.f32 %v514, %v916
        %v918 = vpop.f32.mrb[0].mxu0
        %v919 = vpop.f32.mrb[0].mxu0
        %v920 = vadd.f32 %v514, %v919
        %v921 = vpop.f32.mrb[0].mxu0
        %922 = vdwg.mxu0
        %923 = vst [vmem:[%s226] sm:$0xff] %v573
        %924 = vst [vmem:[%s226 + $0x8] sm:$0xff] %v575
        %925 = vst [vmem:[%s226 + $0x10] sm:$0xff] %v616
        %926 = vst [vmem:[%s226 + $0x18] sm:$0xff] %v618
        %927 = vst [vmem:[%s226 + $0x20] sm:$0xff] %v659
        %928 = vst [vmem:[%s226 + $0x28] sm:$0xff] %v661
        %929 = vst [vmem:[%s226 + $0x30] sm:$0xff] %v702
        %930 = vst [vmem:[%s226 + $0x38] sm:$0xff] %v704
        %931 = vst [vmem:[%s226 + $0x40] sm:$0xff] %v745
        %932 = vst [vmem:[%s226 + $0x48] sm:$0xff] %v747
        %933 = vst [vmem:[%s226 + $0x50] sm:$0xff] %v788
        %934 = vst [vmem:[%s226 + $0x58] sm:$0xff] %v790
        %935 = vst [vmem:[%s226 + $0x60] sm:$0xff] %v831
        %936 = vst [vmem:[%s226 + $0x68] sm:$0xff] %v833
        %937 = vst [vmem:[%s226 + $0x70] sm:$0xff] %v874
        %938 = vst [vmem:[%s226 + $0x78] sm:$0xff] %v876
        %939 = vst [vmem:[%s226 + $0x80] sm:$0xff] %v917
        %940 = vst [vmem:[%s226 + $0x88] sm:$0xff] %v577
        %941 = vst [vmem:[%s226 + $0x90] sm:$0xff] %v579
        %942 = vst [vmem:[%s226 + $0x98] sm:$0xff] %v620
        %943 = vst [vmem:[%s226 + $0xa0] sm:$0xff] %v622
        %944 = vst [vmem:[%s226 + $0xa8] sm:$0xff] %v663
        %945 = vst [vmem:[%s226 + $0xb0] sm:$0xff] %v665
        %946 = vst [vmem:[%s226 + $0xb8] sm:$0xff] %v706
        %947 = vst [vmem:[%s226 + $0xc0] sm:$0xff] %v708
        %948 = vst [vmem:[%s226 + $0xc8] sm:$0xff] %v749
        %949 = vst [vmem:[%s226 + $0xd0] sm:$0xff] %v751
        %950 = vst [vmem:[%s226 + $0xd8] sm:$0xff] %v792
        %951 = vst [vmem:[%s226 + $0xe0] sm:$0xff] %v794
        %952 = vst [vmem:[%s226 + $0xe8] sm:$0xff] %v835
        %953 = vst [vmem:[%s226 + $0xf0] sm:$0xff] %v837
        %954 = vst [vmem:[%s226 + $0xf8] sm:$0xff] %v878
        %955 = vst [vmem:[%s226 + $0x100] sm:$0xff] %v880
        %956 = vst [vmem:[%s226 + $0x108] sm:$0xff] %v920
        %s957 = sand.u32 %s104, 1
        %s958 = scalar_lea.sflag [#allocation4], %s957
        %s959 = sand.u32 %s104, 1
        %s960 = smul.addr %s959, 272
        %s961 = scalar_lea.vmem [#allocation7], %s960
        // Predicated region
        $region41: #{stochastic_decoder_forward.1} parent=31 // pred_check
          %p962 = pneg %p114
        $region42: #{stochastic_decoder_forward.1} parent=31 // pred_check_branch
          %964 = sbr.rel (%p962) target = $region44
        $region43: #{stochastic_decoder_forward.1} parent=31 // pred_region
          %s965 = smul.u32 17, %s23
          %s966 = ssub.s32 65, %s965
          %p967 = scmp.lt.s32.totalorder %s966, 17
          %s968 = scalar_select %p967, %s966, 17
          %s969 = smul.u32 256, %s968
          %s971 = ssub.s32 4352, %s969
          %972 = vsyncadd %s958, %s971
          %p973 = scmp.ne.s32.totalorder 0, %s969
          %s974 = smul.addr %s965, 128
          %s975 = scalar_lea.hbm %s3, %s974
          %s976 = smul.u32 %s968, 8
          %s977 = smul.u32 %s976, 2
          %s978 = sshll.u32 %s961, 4
          %s979 = int_to_ptr.vmem [resolvable:$true] %s978
          %s980 = sshll.u32 %s977, 4
          %984 = dma.vmem_to_hbm [thread:$0]  (%p973), %s979, %s980, %s975, %s958, 2176, 8320, %s976
        $region44: #{stochastic_decoder_forward.1} parent=31 // pred_fallthru
          _
      $region32: #{stochastic_decoder_forward.1} parent=5 // pred_fallthru
        _
      %p985 = scmp.le.s32.totalorder 2, %s18
      // Predicated region
      $region45: #{stochastic_decoder_forward.1} parent=5 // pred_check
        %p986 = pneg %p985
      $region46: #{stochastic_decoder_forward.1} parent=5 // pred_check_branch
        %988 = sbr.rel (%p986) target = $region48
      $region47: #{stochastic_decoder_forward.1} parent=5 // pred_region
        %s989 = ssub.s32 %s18, 2
        // Predicated region
        $region49: #{stochastic_decoder_forward.1} parent=47 // pred_check
          %p990 = pneg %p120
        $region50: #{stochastic_decoder_forward.1} parent=47 // pred_check_branch
          %992 = sbr.rel (%p990) target = $region52
        $region51: #{stochastic_decoder_forward.1} parent=47 // pred_region
          %s993 = sand.u32 %s105, 1
          %s994 = scalar_lea.sflag [#allocation4], %s993
          %s995 = sand.u32 %s105, 1
          %s996 = smul.addr %s995, 272
          %s997 = scalar_lea.vmem [#allocation7], %s996
          %998 = dma.done %s994, 4352
        $region52: #{stochastic_decoder_forward.1} parent=47 // pred_fallthru
          _
      $region48: #{stochastic_decoder_forward.1} parent=5 // pred_fallthru
        _
    $region6: #{stochastic_decoder_forward.1} parent=1 // loop_footer
      %s22 = sadd.s32 1, %s18
    $region7: #{stochastic_decoder_forward.1} parent=1 // loop_footer_branch
      %17 = sbr.rel target = $region3
    $region8: #{stochastic_decoder_forward.1} parent=1 // loop_exit
      _
    %999 = vsyncpa [#allocation3], 1
    %s1000 = scalar_lea.sflag [#allocation3], 1
    %1001 = vsyncpa %s1000, 1
    %1002 = vsyncpa [#allocation6], 1
    %s1003 = scalar_lea.sflag [#allocation6], 1
    %1004 = vsyncpa %s1003, 1
    %1005 = vsyncpa [#allocation4], 1
    %s1006 = scalar_lea.sflag [#allocation4], 1
    %1007 = vsyncpa %s1006, 1

</llo_original>
